<compile_context>
chip_gen: v6e
topology: v6e:2x2x1
jax: 0.10.0
libtpu: 0.0.40
codegen_flags: <defaults>
</compile_context>

<pallas_src>
from functools import partial

import jax
import jax.numpy as jnp
from jax.experimental import pallas as pl
from jax.experimental.pallas import tpu as pltpu


def _vmem_limit_bytes():
    # Scoped-VMEM default is only 16-32 MiB; raise it (generation aware) so
    # realistic whole-image blocks can run near the HBM roofline.
    try:
        return int(pltpu.get_tpu_info().vmem_capacity_bytes) * 3 // 4
    except Exception:
        return None


_VMEM_LIMIT = _vmem_limit_bytes()


def _compiler_params(dim_sem):
    return pltpu.CompilerParams(dimension_semantics=dim_sem,
                                vmem_limit_bytes=_VMEM_LIMIT)


def _conv_down_kernel(x_ref, w_ref, b_ref, o_ref, xpad_ref,
                      *, C, Cout, H, Wh, Ho, Wo):
    # x_ref   : (H, Wh, 2C)    W-parity-repacked input, one batch element
    # w_ref   : (6, 2C, Cout)  folded weights: [2*ky]   -> taps (ky, kx=0|1)
    #                                          [2*ky+1] -> taps (ky, kx=2 | 0)
    # b_ref   : (1, Cout)
    # o_ref   : (Ho, Wo, Cout)
    # xpad_ref: VMEM scratch (H+1, Wh+1, 2C) = input + right/bottom zero pad
    C2 = 2 * C

    # Build the padded image in VMEM (replaces the HBM jnp.pad pass).  Pad
    # regions are re-zeroed every step: scratch persists across grid steps
    # and is per-core under "parallel" semantics.
    xpad_ref[0:H, 0:Wh, :] = x_ref[...]
    xpad_ref[H:H + 1, :, :] = jnp.zeros((1, Wh + 1, C2), dtype=xpad_ref.dtype)
    xpad_ref[0:H, Wh:Wh + 1, :] = jnp.zeros((H, 1, C2), dtype=xpad_ref.dtype)

    acc = None
    for ky in range(3):
        # kx=0 / kx=1 taps are the two lane halves of pair `wo`; the kx=2 tap
        # is the low lane half of pair `wo+1` (its high half hits a zero
        # weight block).  All loads are lane/sublane dense; only the H dim
        # (3rd-minor) is strided by 2.
        a = xpad_ref[pl.ds(ky, Ho, 2), 0:Wo, :]            # (Ho, Wo, 2C)
        c = xpad_ref[pl.ds(ky, Ho, 2), 1:Wo + 1, :]        # (Ho, Wo, 2C)
        pa = a.reshape(Ho * Wo, C2)                        # one reshape per slab
        pc = c.reshape(Ho * Wo, C2)
        # No operand upcast: bf16 inputs stay bf16 on the MXU, accumulate f32.
        d0 = jnp.dot(pa, w_ref[2 * ky], preferred_element_type=jnp.float32)
        d1 = jnp.dot(pc, w_ref[2 * ky + 1], preferred_element_type=jnp.float32)
        acc = d0 + d1 if acc is None else acc + d0 + d1

    acc = acc + b_ref[...].astype(jnp.float32)
    # (Ho*Wo, Cout) -> (Ho, Wo, Cout): lane-dense whenever Cout % 128 == 0
    # (the realistic case); folding Wo into lanes instead would force a real
    # relayout of the MXU result, so we keep the natural 3-D output.
    o_ref[...] = acc.reshape(Ho, Wo, Cout).astype(o_ref.dtype)


def _avgpool_kernel(x_ref, o_ref, *, C, TH):
    # x_ref : (2*TH, Wh, 2C)  repacked rows for TH output rows
    # o_ref : (TH, Wh, C)
    top = x_ref[pl.ds(0, TH, 2), :, :].astype(jnp.float32)   # rows 0,2,...
    bot = x_ref[pl.ds(1, TH, 2), :, :].astype(jnp.float32)   # rows 1,3,...
    s = top + bot                                            # (TH, Wh, 2C)
    o = (s[:, :, 0:C] + s[:, :, C:2 * C]) * 0.25             # lane-half add
    o_ref[...] = o.astype(o_ref.dtype)


def downsample_nhwc(x, params=None, *, with_conv=True):
    """Fast path: x is (N, H, W, C) NHWC, returns NHWC.  No layout glue."""
    N, H, W, C = x.shape
    if with_conv:
        assert W % 2 == 0, "conv downsample fast path needs even W"
        # TODO(synk): odd-W inputs need a different repack geometry; unused in practice.
        w, b = params["w"], params["b"]            # (Cout, Cin, 3, 3), (Cout,)
        Cout = w.shape[0]
        Wh = W // 2
        Ho, Wo = H // 2, W // 2                    # == F.pad(0,1,0,1) + 3x3/s2

        x2 = x.reshape(N, H, Wh, 2 * C)            # free W-parity repack

        # Fold taps into the contraction dim once, outside the kernel.
        wt = jnp.transpose(w, (2, 3, 1, 0))        # (ky, kx, Cin, Cout)
        w_a = jnp.concatenate([wt[:, 0], wt[:, 1]], axis=1)                # (3, 2C, Cout)
        w_c = jnp.concatenate([wt[:, 2], jnp.zeros_like(wt[:, 2])], axis=1)  # (3, 2C, Cout)
        w6 = jnp.stack([w_a, w_c], axis=1).reshape(6, 2 * C, Cout)
        b2 = b.reshape(1, Cout)

        kernel = partial(_conv_down_kernel, C=C, Cout=Cout,
                         H=H, Wh=Wh, Ho=Ho, Wo=Wo)
        return pl.pallas_call(
            kernel,
            out_shape=jax.ShapeDtypeStruct((N, Ho, Wo, Cout), x.dtype),
            grid=(N,),
            in_specs=[
                pl.BlockSpec((None, H, Wh, 2 * C), lambda n: (n, 0, 0, 0)),
                pl.BlockSpec((6, 2 * C, Cout), lambda n: (0, 0, 0)),
                pl.BlockSpec((1, Cout), lambda n: (0, 0)),
            ],
            out_specs=pl.BlockSpec((None, Ho, Wo, Cout), lambda n: (n, 0, 0, 0)),
            scratch_shapes=[pltpu.VMEM((H + 1, Wh + 1, 2 * C), x.dtype)],
            compiler_params=_compiler_params(("parallel",)),
            # TODO(synk): for very large H*W*C (v7x 64 MiB VMEM) add an
            # output-row grid axis with a 1-row halo DMA instead of
            # whole-image input blocks.
        )(x2, w6, b2)
    else:
        Ho, Wo = H // 2, W // 2
        if H % 2 or W % 2:                          # avg_pool floors odd sizes
            x = x[:, :2 * Ho, :2 * Wo, :]
            H, W = 2 * Ho, 2 * Wo
        Wh = Wo
        x2 = x.reshape(N, H, Wh, 2 * C)             # free W-parity repack
        TH = min(Ho, 256)                           # output-row tile
        nt = pl.cdiv(Ho, TH)
        kernel = partial(_avgpool_kernel, C=C, TH=TH)
        return pl.pallas_call(
            kernel,
            out_shape=jax.ShapeDtypeStruct((N, Ho, Wo, C), x.dtype),
            grid=(N, nt),
            in_specs=[pl.BlockSpec((None, 2 * TH, Wh, 2 * C),
                                   lambda n, t: (n, t, 0, 0))],
            out_specs=pl.BlockSpec((None, TH, Wh, C),
                                   lambda n, t: (n, t, 0, 0)),
            compiler_params=_compiler_params(("parallel", "parallel")),
        )(x2)


def downsample(x, params=None, *, with_conv=True):
    """PyTorch-compatible NCHW interface.  The transposes are glue only; if
    the surrounding model keeps NHWC activations, call downsample_nhwc()
    directly and they disappear entirely."""
    x_nhwc = jnp.transpose(x, (0, 2, 3, 1))
    y_nhwc = downsample_nhwc(x_nhwc, params, with_conv=with_conv)
    return jnp.transpose(y_nhwc, (0, 3, 1, 2))


# ----------------------------- references ---------------------------------

def _conv_reference(x, w, b):
    xp = jnp.pad(x, ((0, 0), (0, 0), (0, 1), (0, 1)))
    y = jax.lax.conv_general_dilated(
        xp, w, window_strides=(2, 2), padding="VALID",
        dimension_numbers=("NCHW", "OIHW", "NCHW"))
    return y + b.reshape(1, -1, 1, 1)


def _pool_reference(x):
    N, C, H, W = x.shape
    return x.reshape(N, C, H // 2, 2, W // 2, 2).mean(axis=(3, 5))


if __name__ == "__main__":
    key = jax.random.PRNGKey(0)
    kx, kw, kb = jax.random.split(key, 3)

    N, C, H, W = 2, 4, 16, 16
    x = jax.random.normal(kx, (N, C, H, W), jnp.float32)

    # Deterministic Conv2d-style init (kaiming-uniform-ish bounds).
    bound = 1.0 / float((C * 3 * 3) ** 0.5)
    w = jax.random.uniform(kw, (C, C, 3, 3), jnp.float32, -bound, bound)
    b = jax.random.uniform(kb, (C,), jnp.float32, -bound, bound)
    params = {"w": w, "b": b}

    y_conv = downsample(x, params, with_conv=True)      # (2, 4, 8, 8)
    y_pool = downsample(x, with_conv=False)             # (2, 4, 8, 8)
    # NHWC fast path (no transposes) — same math.
    y_conv_nhwc = downsample_nhwc(jnp.transpose(x, (0, 2, 3, 1)),
                                  params, with_conv=True)
    jax.block_until_ready((y_conv, y_pool, y_conv_nhwc))

    y_conv_ref = _conv_reference(x, w, b)
    y_pool_ref = _pool_reference(x)

    assert y_conv.shape == y_conv_ref.shape == (N, C, H // 2, W // 2)
    assert y_pool.shape == y_pool_ref.shape == (N, C, H // 2, W // 2)
    assert jnp.allclose(y_conv, y_conv_ref, atol=2e-4, rtol=2e-4)
    assert jnp.allclose(y_pool, y_pool_ref, atol=1e-5, rtol=1e-5)
    assert jnp.allclose(jnp.transpose(y_conv_nhwc, (0, 3, 1, 2)), y_conv_ref,
                        atol=2e-4, rtol=2e-4)
    print("KERNEL_OK")
</pallas_src>

<mosaic_0001>
module attributes {stable_mosaic.version = 11 : i64} {
  func.func @_conv_down_kernel(%arg0: i32, %arg1: memref<1x16x8x8xf32, #tpu.memory_space<vmem>>, %arg2: memref<6x8x4xf32, #tpu.memory_space<vmem>>, %arg3: memref<1x4xf32, #tpu.memory_space<vmem>>, %arg4: memref<1x8x8x4xf32, #tpu.memory_space<vmem>>, %arg5: memref<17x9x8xf32, #tpu.memory_space<vmem>>) attributes {dimension_semantics = [#tpu.dimension_semantics<parallel>], iteration_bounds = array<i64: 2>, scalar_prefetch = 0 : i64, scratch_operands = 1 : i64, tpu.core_type = #tpu.core_type<tc>, window_params = [{transform_indices = @transform_0, window_bounds = array<i64: 1, 16, 8, 8>}, {pipeline_mode = #tpu.pipeline_mode<synchronous>, transform_indices = @transform_1, window_bounds = array<i64: 6, 8, 4>}, {pipeline_mode = #tpu.pipeline_mode<synchronous>, transform_indices = @transform_2, window_bounds = array<i64: 1, 4>}, {transform_indices = @transform_3, window_bounds = array<i64: 1, 8, 8, 4>}]} {
    %c0 = arith.constant 0 : index
    %c0_0 = arith.constant 0 : index
    %c0_1 = arith.constant 0 : index
    %c0_2 = arith.constant 0 : index
    %0 = vector.load %arg1[%c0, %c0_0, %c0_1, %c0_2] : memref<1x16x8x8xf32, #tpu.memory_space<vmem>>, vector<1x16x8x8xf32>
    %1 = vector.shape_cast %0 : vector<1x16x8x8xf32> to vector<16x8x8xf32>
    %c0_3 = arith.constant 0 : index
    %c0_4 = arith.constant 0 : index
    %c0_5 = arith.constant 0 : index
    %2 = vector.load %arg5[%c0_3, %c0_4, %c0_5] : memref<17x9x8xf32, #tpu.memory_space<vmem>>, vector<16x8x8xf32>
    tpu.vector_store %arg5[%c0_3, %c0_4, %c0_5], %1 {strides = array<i32>} : memref<17x9x8xf32, #tpu.memory_space<vmem>>, vector<16x8x8xf32>,
    %cst = arith.constant 0.000000e+00 : f32
    %3 = vector.broadcast %cst : f32 to vector<1x9x8xf32>
    %c16 = arith.constant 16 : index
    %c0_6 = arith.constant 0 : index
    %c0_7 = arith.constant 0 : index
    %4 = vector.load %arg5[%c16, %c0_6, %c0_7] : memref<17x9x8xf32, #tpu.memory_space<vmem>>, vector<1x9x8xf32>
    tpu.vector_store %arg5[%c16, %c0_6, %c0_7], %3 {strides = array<i32>} : memref<17x9x8xf32, #tpu.memory_space<vmem>>, vector<1x9x8xf32>,
    %cst_8 = arith.constant 0.000000e+00 : f32
    %5 = vector.broadcast %cst_8 : f32 to vector<16x1x8xf32>
    %c0_9 = arith.constant 0 : index
    %c8 = arith.constant 8 : index
    %c0_10 = arith.constant 0 : index
    %6 = vector.load %arg5[%c0_9, %c8, %c0_10] : memref<17x9x8xf32, #tpu.memory_space<vmem>>, vector<16x1x8xf32>
    tpu.vector_store %arg5[%c0_9, %c8, %c0_10], %5 {strides = array<i32>} : memref<17x9x8xf32, #tpu.memory_space<vmem>>, vector<16x1x8xf32>,
    %c0_11 = arith.constant 0 : index
    %c0_12 = arith.constant 0 : index
    %c0_13 = arith.constant 0 : index
    %7 = tpu.strided_load %arg5[%c0_11, %c0_12, %c0_13] {strides = array<i32: 2, 1, 1>} : memref<17x9x8xf32, #tpu.memory_space<vmem>>, vector<8x8x8xf32>
    %c0_14 = arith.constant 0 : index
    %c1 = arith.constant 1 : index
    %c0_15 = arith.constant 0 : index
    %8 = tpu.strided_load %arg5[%c0_14, %c1, %c0_15] {strides = array<i32: 2, 1, 1>} : memref<17x9x8xf32, #tpu.memory_space<vmem>>, vector<8x8x8xf32>
    %9 = vector.shape_cast %7 : vector<8x8x8xf32> to vector<64x8xf32>
    %10 = vector.shape_cast %8 : vector<8x8x8xf32> to vector<64x8xf32>
    %c0_16 = arith.constant 0 : index
    %c0_17 = arith.constant 0 : index
    %c0_18 = arith.constant 0 : index
    %11 = vector.load %arg2[%c0_16, %c0_17, %c0_18] : memref<6x8x4xf32, #tpu.memory_space<vmem>>, vector<1x8x4xf32>
    %12 = vector.shape_cast %11 : vector<1x8x4xf32> to vector<8x4xf32>
    %cst_19 = arith.constant dense<0.000000e+00> : vector<64x4xf32>
    %13 = tpu.matmul %9, %12, %cst_19 {dimension_numbers = #tpu.dot_dimension_numbers<[1], [0], [0], [1], [0, 0, 1, 1], [], []>} : vector<64x8xf32>, vector<8x4xf32>, vector<64x4xf32> -> vector<64x4xf32>
    %c1_20 = arith.constant 1 : index
    %c0_21 = arith.constant 0 : index
    %c0_22 = arith.constant 0 : index
    %14 = vector.load %arg2[%c1_20, %c0_21, %c0_22] : memref<6x8x4xf32, #tpu.memory_space<vmem>>, vector<1x8x4xf32>
    %15 = vector.shape_cast %14 : vector<1x8x4xf32> to vector<8x4xf32>
    %cst_23 = arith.constant dense<0.000000e+00> : vector<64x4xf32>
    %16 = tpu.matmul %10, %15, %cst_23 {dimension_numbers = #tpu.dot_dimension_numbers<[1], [0], [0], [1], [0, 0, 1, 1], [], []>} : vector<64x8xf32>, vector<8x4xf32>, vector<64x4xf32> -> vector<64x4xf32>
    %17 = arith.addf %13, %16 : vector<64x4xf32>
    %c1_24 = arith.constant 1 : index
    %c0_25 = arith.constant 0 : index
    %c0_26 = arith.constant 0 : index
    %18 = tpu.strided_load %arg5[%c1_24, %c0_25, %c0_26] {strides = array<i32: 2, 1, 1>} : memref<17x9x8xf32, #tpu.memory_space<vmem>>, vector<8x8x8xf32>
    %c1_27 = arith.constant 1 : index
    %c1_28 = arith.constant 1 : index
    %c0_29 = arith.constant 0 : index
    %19 = tpu.strided_load %arg5[%c1_27, %c1_28, %c0_29] {strides = array<i32: 2, 1, 1>} : memref<17x9x8xf32, #tpu.memory_space<vmem>>, vector<8x8x8xf32>
    %20 = vector.shape_cast %18 : vector<8x8x8xf32> to vector<64x8xf32>
    %21 = vector.shape_cast %19 : vector<8x8x8xf32> to vector<64x8xf32>
    %c2 = arith.constant 2 : index
    %c0_30 = arith.constant 0 : index
    %c0_31 = arith.constant 0 : index
    %22 = vector.load %arg2[%c2, %c0_30, %c0_31] : memref<6x8x4xf32, #tpu.memory_space<vmem>>, vector<1x8x4xf32>
    %23 = vector.shape_cast %22 : vector<1x8x4xf32> to vector<8x4xf32>
    %cst_32 = arith.constant dense<0.000000e+00> : vector<64x4xf32>
    %24 = tpu.matmul %20, %23, %cst_32 {dimension_numbers = #tpu.dot_dimension_numbers<[1], [0], [0], [1], [0, 0, 1, 1], [], []>} : vector<64x8xf32>, vector<8x4xf32>, vector<64x4xf32> -> vector<64x4xf32>
    %c3 = arith.constant 3 : index
    %c0_33 = arith.constant 0 : index
    %c0_34 = arith.constant 0 : index
    %25 = vector.load %arg2[%c3, %c0_33, %c0_34] : memref<6x8x4xf32, #tpu.memory_space<vmem>>, vector<1x8x4xf32>
    %26 = vector.shape_cast %25 : vector<1x8x4xf32> to vector<8x4xf32>
    %cst_35 = arith.constant dense<0.000000e+00> : vector<64x4xf32>
    %27 = tpu.matmul %21, %26, %cst_35 {dimension_numbers = #tpu.dot_dimension_numbers<[1], [0], [0], [1], [0, 0, 1, 1], [], []>} : vector<64x8xf32>, vector<8x4xf32>, vector<64x4xf32> -> vector<64x4xf32>
    %28 = arith.addf %17, %24 : vector<64x4xf32>
    %29 = arith.addf %28, %27 : vector<64x4xf32>
    %c2_36 = arith.constant 2 : index
    %c0_37 = arith.constant 0 : index
    %c0_38 = arith.constant 0 : index
    %30 = tpu.strided_load %arg5[%c2_36, %c0_37, %c0_38] {strides = array<i32: 2, 1, 1>} : memref<17x9x8xf32, #tpu.memory_space<vmem>>, vector<8x8x8xf32>
    %c2_39 = arith.constant 2 : index
    %c1_40 = arith.constant 1 : index
    %c0_41 = arith.constant 0 : index
    %31 = tpu.strided_load %arg5[%c2_39, %c1_40, %c0_41] {strides = array<i32: 2, 1, 1>} : memref<17x9x8xf32, #tpu.memory_space<vmem>>, vector<8x8x8xf32>
    %32 = vector.shape_cast %30 : vector<8x8x8xf32> to vector<64x8xf32>
    %33 = vector.shape_cast %31 : vector<8x8x8xf32> to vector<64x8xf32>
    %c4 = arith.constant 4 : index
    %c0_42 = arith.constant 0 : index
    %c0_43 = arith.constant 0 : index
    %34 = vector.load %arg2[%c4, %c0_42, %c0_43] : memref<6x8x4xf32, #tpu.memory_space<vmem>>, vector<1x8x4xf32>
    %35 = vector.shape_cast %34 : vector<1x8x4xf32> to vector<8x4xf32>
    %cst_44 = arith.constant dense<0.000000e+00> : vector<64x4xf32>
    %36 = tpu.matmul %32, %35, %cst_44 {dimension_numbers = #tpu.dot_dimension_numbers<[1], [0], [0], [1], [0, 0, 1, 1], [], []>} : vector<64x8xf32>, vector<8x4xf32>, vector<64x4xf32> -> vector<64x4xf32>
    %c5 = arith.constant 5 : index
    %c0_45 = arith.constant 0 : index
    %c0_46 = arith.constant 0 : index
    %37 = vector.load %arg2[%c5, %c0_45, %c0_46] : memref<6x8x4xf32, #tpu.memory_space<vmem>>, vector<1x8x4xf32>
    %38 = vector.shape_cast %37 : vector<1x8x4xf32> to vector<8x4xf32>
    %cst_47 = arith.constant dense<0.000000e+00> : vector<64x4xf32>
    %39 = tpu.matmul %33, %38, %cst_47 {dimension_numbers = #tpu.dot_dimension_numbers<[1], [0], [0], [1], [0, 0, 1, 1], [], []>} : vector<64x8xf32>, vector<8x4xf32>, vector<64x4xf32> -> vector<64x4xf32>
    %40 = arith.addf %29, %36 : vector<64x4xf32>
    %41 = arith.addf %40, %39 : vector<64x4xf32>
    %c0_48 = arith.constant 0 : index
    %c0_49 = arith.constant 0 : index
    %42 = vector.load %arg3[%c0_48, %c0_49] : memref<1x4xf32, #tpu.memory_space<vmem>>, vector<1x4xf32>
    %43 = vector.broadcast %42 : vector<1x4xf32> to vector<64x4xf32>
    %44 = arith.addf %41, %43 : vector<64x4xf32>
    %45 = vector.shape_cast %44 : vector<64x4xf32> to vector<8x8x4xf32>
    %c0_50 = arith.constant 0 : index
    %c0_51 = arith.constant 0 : index
    %c0_52 = arith.constant 0 : index
    %c0_53 = arith.constant 0 : index
    %46 = vector.load %arg4[%c0_50, %c0_51, %c0_52, %c0_53] : memref<1x8x8x4xf32, #tpu.memory_space<vmem>>, vector<1x8x8x4xf32>
    %47 = vector.shape_cast %46 : vector<1x8x8x4xf32> to vector<8x8x4xf32>
    %48 = vector.shape_cast %45 : vector<8x8x4xf32> to vector<1x8x8x4xf32>
    tpu.vector_store %arg4[%c0_50, %c0_51, %c0_52, %c0_53], %48 {strides = array<i32>} : memref<1x8x8x4xf32, #tpu.memory_space<vmem>>, vector<1x8x8x4xf32>,
    return
  }
  func.func @transform_0(%arg0: i32) -> (i32, i32, i32, i32) {
    %c0_i32 = arith.constant 0 : i32
    %c0_i32_0 = arith.constant 0 : i32
    %c0_i32_1 = arith.constant 0 : i32
    %c0_i32_2 = arith.constant 0 : i32
    return %arg0, %c0_i32, %c0_i32_0, %c0_i32_1 : i32, i32, i32, i32
  }
  func.func @transform_1(%arg0: i32) -> (i32, i32, i32) {
    %c0_i32 = arith.constant 0 : i32
    %c0_i32_0 = arith.constant 0 : i32
    %c0_i32_1 = arith.constant 0 : i32
    %c0_i32_2 = arith.constant 0 : i32
    return %c0_i32, %c0_i32_0, %c0_i32_1 : i32, i32, i32
  }
  func.func @transform_2(%arg0: i32) -> (i32, i32) {
    %c0_i32 = arith.constant 0 : i32
    %c0_i32_0 = arith.constant 0 : i32
    %c0_i32_1 = arith.constant 0 : i32
    return %c0_i32, %c0_i32_0 : i32, i32
  }
  func.func @transform_3(%arg0: i32) -> (i32, i32, i32, i32) {
    %c0_i32 = arith.constant 0 : i32
    %c0_i32_0 = arith.constant 0 : i32
    %c0_i32_1 = arith.constant 0 : i32
    %c0_i32_2 = arith.constant 0 : i32
    return %arg0, %c0_i32, %c0_i32_0, %c0_i32_1 : i32, i32, i32, i32
  }
}

</mosaic_0001>

<llo_original>
// kernel: tpu_custom_call.1
$region0: #{tpu_custom_call.1}
  #allocation0 [shape = 'u32[]', space=smem, size = 0x4, offset = 0x4, fixed_abs, tag = 'smem constant byte address 0x4 - core index']
  #allocation1 [shape = 'u32[144,128]{1,0:T(1,128)}', space=vmem, size = 0x12000, scoped, tag = 'internal scratch']
  #allocation2 [shape = 'f32[17,9,8]{2,1,0:T(8,128)}', space=vmem, size = 0x22000, scoped, tag = 'scratch operand']
  %s0 = inlined_call_operand.vmem [shape: f32[2,16,8,8], index: 0, kind: input, shape index: {}]
  %s1 = inlined_call_operand.vmem [shape: f32[6,8,4], index: 1, kind: input, shape index: {}]
  %s2 = inlined_call_operand.vmem [shape: f32[1,4], index: 2, kind: input, shape index: {}]
  %s3 = inlined_call_operand.vmem [shape: f32[2,8,8,4], index: 3, kind: output, shape index: {}]
  %s4 = sld [smem:[#allocation0]]
  $region45: #{tpu_custom_call.1} parent=0
    _
  %s6 = ssub.s32 1, %s4
  %s7 = scalar_select 0, %s6, %s4
  loop: start=0, step=1, limit=4
  $region2: #{tpu_custom_call.1} parent=0 // loop_pre_header
    _
  $region3: #{tpu_custom_call.1} parent=0 // loop_header
    %s9 = sphi 0, %s13
    %p10 = scmp.ge.s32.totalorder %s9, 4
    %s19 = sphi 0, %s21
    %s22 = sphi 0, %s19
    %s23 = sphi 0, %s22
    %s39 = sphi 0, %s23
    %s43 = sphi 0, %s43
    %s45 = sphi 0, %s43
    %s46 = sphi 0, %s45
    %s60 = sphi 0, %s46
    %s64 = sphi 0, %s64
    %s66 = sphi 0, %s64
    %s67 = sphi 0, %s66
    %s81 = sphi 0, %s67
    %s87 = sphi 0, %s89
    %s90 = sphi 0, %s87
    %s91 = sphi 0, %s90
    %s107 = sphi 0, %s91
  $region4: #{tpu_custom_call.1} parent=0 // loop_header_branch
    %12 = sbr.rel (%p10) target = $region8
  $region5: #{tpu_custom_call.1} parent=0 // loop_body
    %s14 = ssub.s32 %s9, 1
    %s15 = ssub.s32 %s9, 2
    %s16 = sadd.s32 %s9, 1
    %s17 = ssub.s32 %s9, %s16
    %p18 = scmp.eq.s32.totalorder %s17, 0
    %s20 = sadd.s32 %s19, 1
    %s21 = scalar_select %p18, %s19, %s20
    %p24 = pneg %p18
    %p25 = scmp.eq.s32.totalorder %s9, 1
    %p26 = por %p24, %p25
    %p27 = scmp.ne.s32.totalorder %s19, %s22
    %p28 = scmp.eq.s32.totalorder %s9, 0
    %p29 = por %p27, %p28
    %p30 = scmp.ne.s32.totalorder %s19, %s22
    %p31 = scmp.eq.s32.totalorder %s14, 1
    %p32 = por %p30, %p31
    %p33 = scmp.ne.s32.totalorder %s22, %s23
    %p34 = scmp.eq.s32.totalorder %s14, 0
    %p35 = por %p33, %p34
    %p36 = scmp.ne.s32.totalorder %s22, %s23
    %p37 = scmp.eq.s32.totalorder %s15, 1
    %p38 = por %p36, %p37
    %p40 = scmp.ne.s32.totalorder %s23, %s39
    %p41 = scmp.eq.s32.totalorder %s15, 0
    %p42 = por %p40, %p41
    %s44 = sadd.s32 %s43, 1
    %p47 = scmp.eq.s32.totalorder %s9, 1
    %p48 = scmp.ne.s32.totalorder %s43, %s45
    %p49 = scmp.eq.s32.totalorder %s9, 0
    %p50 = por %p48, %p49
    %p51 = scmp.ne.s32.totalorder %s43, %s45
    %p52 = scmp.eq.s32.totalorder %s14, 1
    %p53 = por %p51, %p52
    %p54 = scmp.ne.s32.totalorder %s45, %s46
    %p55 = scmp.eq.s32.totalorder %s14, 0
    %p56 = por %p54, %p55
    %p57 = scmp.ne.s32.totalorder %s45, %s46
    %p58 = scmp.eq.s32.totalorder %s15, 1
    %p59 = por %p57, %p58
    %p61 = scmp.ne.s32.totalorder %s46, %s60
    %p62 = scmp.eq.s32.totalorder %s15, 0
    %p63 = por %p61, %p62
    %s65 = sadd.s32 %s64, 1
    %p68 = scmp.eq.s32.totalorder %s9, 1
    %p69 = scmp.ne.s32.totalorder %s64, %s66
    %p70 = scmp.eq.s32.totalorder %s9, 0
    %p71 = por %p69, %p70
    %p72 = scmp.ne.s32.totalorder %s64, %s66
    %p73 = scmp.eq.s32.totalorder %s14, 1
    %p74 = por %p72, %p73
    %p75 = scmp.ne.s32.totalorder %s66, %s67
    %p76 = scmp.eq.s32.totalorder %s14, 0
    %p77 = por %p75, %p76
    %p78 = scmp.ne.s32.totalorder %s66, %s67
    %p79 = scmp.eq.s32.totalorder %s15, 1
    %p80 = por %p78, %p79
    %p82 = scmp.ne.s32.totalorder %s67, %s81
    %p83 = scmp.eq.s32.totalorder %s15, 0
    %p84 = por %p82, %p83
    %s85 = ssub.s32 %s9, %s16
    %p86 = scmp.eq.s32.totalorder %s85, 0
    %s88 = sadd.s32 %s87, 1
    %s89 = scalar_select %p86, %s87, %s88
    %p92 = pneg %p86
    %p93 = scmp.eq.s32.totalorder %s9, 1
    %p94 = por %p92, %p93
    %p95 = scmp.ne.s32.totalorder %s87, %s90
    %p96 = scmp.eq.s32.totalorder %s9, 0
    %p97 = por %p95, %p96
    %p98 = scmp.ne.s32.totalorder %s87, %s90
    %p99 = scmp.eq.s32.totalorder %s14, 1
    %p100 = por %p98, %p99
    %p101 = scmp.ne.s32.totalorder %s90, %s91
    %p102 = scmp.eq.s32.totalorder %s14, 0
    %p103 = por %p101, %p102
    %p104 = scmp.ne.s32.totalorder %s90, %s91
    %p105 = scmp.eq.s32.totalorder %s15, 1
    %p106 = por %p104, %p105
    %p108 = scmp.ne.s32.totalorder %s91, %s107
    %p109 = scmp.eq.s32.totalorder %s15, 0
    %p110 = por %p108, %p109
    %p111 = scmp.le.s32.totalorder 1, %s9
    %p112 = scmp.lt.s32.totalorder %s9, 3
    %p113 = pnand %p111, %p112
    %p114 = pneg %p113
    // Predicated region
    $region9: #{tpu_custom_call.1} parent=5 // pred_check
      _
    $region10: #{tpu_custom_call.1} parent=5 // pred_check_branch
      %116 = sbr.rel (%p113) target = $region12
    $region11: #{tpu_custom_call.1} parent=5 // pred_region
      %s117 = ssub.s32 %s9, 1
      // Predicated region
      $region13: #{tpu_custom_call.1} parent=11 // pred_check
        %p118 = pneg %p56
      $region14: #{tpu_custom_call.1} parent=11 // pred_check_branch
        %120 = sbr.rel (%p118) target = $region16
      $region15: #{tpu_custom_call.1} parent=11 // pred_region
        _
      $region16: #{tpu_custom_call.1} parent=11 // pred_fallthru
        _
      // Predicated region
      $region17: #{tpu_custom_call.1} parent=11 // pred_check
        %p121 = pneg %p77
      $region18: #{tpu_custom_call.1} parent=11 // pred_check_branch
        %123 = sbr.rel (%p121) target = $region20
      $region19: #{tpu_custom_call.1} parent=11 // pred_region
        _
      $region20: #{tpu_custom_call.1} parent=11 // pred_fallthru
        _
    $region12: #{tpu_custom_call.1} parent=5 // pred_fallthru
      _
    %p124 = scmp.lt.s32.totalorder %s9, 2
    // Predicated region
    $region21: #{tpu_custom_call.1} parent=5 // pred_check
      %p125 = pneg %p124
    $region22: #{tpu_custom_call.1} parent=5 // pred_check_branch
      %127 = sbr.rel (%p125) target = $region24
    $region23: #{tpu_custom_call.1} parent=5 // pred_region
      // Predicated region
      $region25: #{tpu_custom_call.1} parent=23 // pred_check
        %p128 = pneg %p29
      $region26: #{tpu_custom_call.1} parent=23 // pred_check_branch
        %130 = sbr.rel (%p128) target = $region28
      $region27: #{tpu_custom_call.1} parent=23 // pred_region
        %p131 = scmp.lt.s32.totalorder %s9, 1
        %s132 = scalar_select %p131, %s9, 1
        %s133 = smul.addr %s132, 16
        %s134 = smul.addr %s133, 8
        %s135 = scalar_lea.vmem %s0, %s134
      $region28: #{tpu_custom_call.1} parent=23 // pred_fallthru
        _
    $region24: #{tpu_custom_call.1} parent=5 // pred_fallthru
      _
    %p136 = scmp.le.s32.totalorder 1, %s9
    %p137 = scmp.lt.s32.totalorder %s9, 3
    %p138 = pnand %p136, %p137
    %p139 = pneg %p138
    // Predicated region
    $region29: #{tpu_custom_call.1} parent=5 // pred_check
      _
    $region30: #{tpu_custom_call.1} parent=5 // pred_check_branch
      %141 = sbr.rel (%p138) target = $region32
    $region31: #{tpu_custom_call.1} parent=5 // pred_region
      %s142 = ssub.s32 %s9, 1
      %p143 = scmp.lt.s32.totalorder %s14, 1
      %s144 = scalar_select %p143, %s14, 1
      %s145 = smul.addr %s144, 16
      %s146 = smul.addr %s145, 8
      %s147 = scalar_lea.vmem %s0, %s146
      %p148 = pneg %p35
      %p149 = pneg %p32
      %p150 = pneg %p56
      %p151 = pneg %p53
      %p152 = pneg %p77
      %p153 = pneg %p74
      %p154 = pneg %p103
      %p155 = pneg %p100
      %p156 = scmp.lt.s32.totalorder %s14, 1
      %s157 = scalar_select %p156, %s14, 1
      %s158 = smul.addr %s157, 8
      %s159 = smul.addr %s158, 8
      %s160 = scalar_lea.vmem %s3, %s159
      %p161 = scmp.lt.s32.totalorder %s14, 1
      %s162 = scalar_select %p161, %s14, 1
      %s163 = smul.addr %s162, 16
      %s164 = smul.addr %s163, 8
      %s165 = scalar_lea.vmem %s0, %s164
      %p166 = scmp.lt.s32.totalorder %s14, 1
      %s167 = scalar_select %p166, %s14, 1
      %s168 = smul.addr %s167, 8
      %s169 = smul.addr %s168, 8
      %s170 = scalar_lea.vmem %s3, %s169
      %v171 = vld [vmem:[%s165] sm:$0xff]
      %v172 = vld [vmem:[%s165 + $0x8] sm:$0xff]
      %v173 = vld [vmem:[%s165 + $0x10] sm:$0xff]
      %v174 = vld [vmem:[%s165 + $0x18] sm:$0xff]
      %v175 = vld [vmem:[%s165 + $0x20] sm:$0xff]
      %v176 = vld [vmem:[%s165 + $0x28] sm:$0xff]
      %v177 = vld [vmem:[%s165 + $0x30] sm:$0xff]
      %v178 = vld [vmem:[%s165 + $0x38] sm:$0xff]
      %v179 = vld [vmem:[%s165 + $0x40] sm:$0xff]
      %v180 = vld [vmem:[%s165 + $0x48] sm:$0xff]
      %v181 = vld [vmem:[%s165 + $0x50] sm:$0xff]
      %v182 = vld [vmem:[%s165 + $0x58] sm:$0xff]
      %v183 = vld [vmem:[%s165 + $0x60] sm:$0xff]
      %v184 = vld [vmem:[%s165 + $0x68] sm:$0xff]
      %v185 = vld [vmem:[%s165 + $0x70] sm:$0xff]
      %v186 = vld [vmem:[%s165 + $0x78] sm:$0xff]
      %vm187 = vcmask 64512
      %188 = vst.msk [vmem:[#allocation2] sm:$0xff] %vm187, %v171
      %189 = vst.msk [vmem:[#allocation2 + $0x10] sm:$0xff] %vm187, %v172
      %190 = vst.msk [vmem:[#allocation2 + $0x20] sm:$0xff] %vm187, %v173
      %191 = vst.msk [vmem:[#allocation2 + $0x30] sm:$0xff] %vm187, %v174
      %192 = vst.msk [vmem:[#allocation2 + $0x40] sm:$0xff] %vm187, %v175
      %193 = vst.msk [vmem:[#allocation2 + $0x50] sm:$0xff] %vm187, %v176
      %194 = vst.msk [vmem:[#allocation2 + $0x60] sm:$0xff] %vm187, %v177
      %195 = vst.msk [vmem:[#allocation2 + $0x70] sm:$0xff] %vm187, %v178
      %196 = vst.msk [vmem:[#allocation2 + $0x80] sm:$0xff] %vm187, %v179
      %197 = vst.msk [vmem:[#allocation2 + $0x90] sm:$0xff] %vm187, %v180
      %198 = vst.msk [vmem:[#allocation2 + $0xa0] sm:$0xff] %vm187, %v181
      %199 = vst.msk [vmem:[#allocation2 + $0xb0] sm:$0xff] %vm187, %v182
      %200 = vst.msk [vmem:[#allocation2 + $0xc0] sm:$0xff] %vm187, %v183
      %201 = vst.msk [vmem:[#allocation2 + $0xd0] sm:$0xff] %vm187, %v184
      %202 = vst.msk [vmem:[#allocation2 + $0xe0] sm:$0xff] %vm187, %v185
      %203 = vst.msk [vmem:[#allocation2 + $0xf0] sm:$0xff] %vm187, %v186
      %s204 = scalar_lea.vmem [#allocation2], 256
      %205 = vst.msk [vmem:[%s204] sm:$0xff] %vm187, 0.0
      %vm206 = vcmask 57344
      %207 = vst.msk [vmem:[%s204 + $0x8] sm:$0x1] %vm206, 0.0
      %208 = vst.msk [vmem:[#allocation2 + $0x8] sm:$0x1] %vm206, 0.0
      %209 = vst.msk [vmem:[#allocation2 + $0x18] sm:$0x1] %vm206, 0.0
      %210 = vst.msk [vmem:[#allocation2 + $0x28] sm:$0x1] %vm206, 0.0
      %211 = vst.msk [vmem:[#allocation2 + $0x38] sm:$0x1] %vm206, 0.0
      %212 = vst.msk [vmem:[#allocation2 + $0x48] sm:$0x1] %vm206, 0.0
      %213 = vst.msk [vmem:[#allocation2 + $0x58] sm:$0x1] %vm206, 0.0
      %214 = vst.msk [vmem:[#allocation2 + $0x68] sm:$0x1] %vm206, 0.0
      %215 = vst.msk [vmem:[#allocation2 + $0x78] sm:$0x1] %vm206, 0.0
      %216 = vst.msk [vmem:[#allocation2 + $0x88] sm:$0x1] %vm206, 0.0
      %217 = vst.msk [vmem:[#allocation2 + $0x98] sm:$0x1] %vm206, 0.0
      %218 = vst.msk [vmem:[#allocation2 + $0xa8] sm:$0x1] %vm206, 0.0
      %219 = vst.msk [vmem:[#allocation2 + $0xb8] sm:$0x1] %vm206, 0.0
      %220 = vst.msk [vmem:[#allocation2 + $0xc8] sm:$0x1] %vm206, 0.0
      %221 = vst.msk [vmem:[#allocation2 + $0xd8] sm:$0x1] %vm206, 0.0
      %222 = vst.msk [vmem:[#allocation2 + $0xe8] sm:$0x1] %vm206, 0.0
      %223 = vst.msk [vmem:[#allocation2 + $0xf8] sm:$0x1] %vm206, 0.0
      %v224 = vld [vmem:[#allocation2] sm:$0xff]
      %v225 = vld [vmem:[#allocation2 + $0x20] sm:$0xff]
      %v226 = vld [vmem:[#allocation2 + $0x40] sm:$0xff]
      %v227 = vld [vmem:[#allocation2 + $0x60] sm:$0xff]
      %v228 = vld [vmem:[#allocation2 + $0x80] sm:$0xff]
      %v229 = vld [vmem:[#allocation2 + $0xa0] sm:$0xff]
      %v230 = vld [vmem:[#allocation2 + $0xc0] sm:$0xff]
      %v231 = vld [vmem:[#allocation2 + $0xe0] sm:$0xff]
      %v232 = vld [vmem:[#allocation2 + $0x1] sm:$0xff]
      %v233 = vld [vmem:[#allocation2 + $0x21] sm:$0xff]
      %v234 = vld [vmem:[#allocation2 + $0x41] sm:$0xff]
      %v235 = vld [vmem:[#allocation2 + $0x61] sm:$0xff]
      %v236 = vld [vmem:[#allocation2 + $0x81] sm:$0xff]
      %v237 = vld [vmem:[#allocation2 + $0xa1] sm:$0xff]
      %v238 = vld [vmem:[#allocation2 + $0xc1] sm:$0xff]
      %v239 = vld [vmem:[#allocation2 + $0xe1] sm:$0xff]
      %v240 = vld [vmem:[%s1] sm:$0xff]
      %s241 = scalar_lea.vmem %s1, 8
      %v242 = vld [vmem:[%s241] sm:$0xff]
      %v244 = vsel %vm187, %v232, 0
      %v247 = vsel %vm187, %v233, 0
      %v250 = vsel %vm187, %v234, 0
      %v253 = vsel %vm187, %v235, 0
      %v256 = vsel %vm187, %v236, 0
      %v259 = vsel %vm187, %v237, 0
      %v262 = vsel %vm187, %v238, 0
      %v265 = vsel %vm187, %v239, 0
      %267 = vmatprep.subr.mxu0 0.0
      %268 = vmatpush1.msra.mxu0 0.0
      %269 = vmatprep.subr.mxu0 0.0
      %270 = vmatpush1.msra.mxu0 0.0
      %271 = vmatprep.subr.mxu0 0.0
      %272 = vmatpush1.msra.mxu0 0.0
      %273 = vmatprep.subr.mxu0 0.0
      %274 = vmatpush1.msra.mxu0 0.0
      %275 = vmatprep.subr.mxu0 0.0
      %276 = vmatpush1.msra.mxu0 0.0
      %277 = vmatprep.subr.mxu0 0.0
      %278 = vmatpush1.msra.mxu0 0.0
      %279 = vmatprep.subr.mxu0 0.0
      %280 = vmatpush1.msra.mxu0 0.0
      %281 = vmatprep.subr.mxu0 0.0
      %282 = vmatpush1.msra.mxu0 0.0
      %283 = vmatprep.subr.mxu0 0.0
      %284 = vmatpush1.msra.mxu0 0.0
      %285 = vmatprep.subr.mxu0 0.0
      %286 = vmatpush1.msra.mxu0 0.0
      %287 = vmatprep.subr.mxu0 0.0
      %288 = vmatpush1.msra.mxu0 0.0
      %289 = vmatprep.subr.mxu0 0.0
      %290 = vmatpush1.msra.mxu0 0.0
      %291 = vmatprep.subr.mxu0 0.0
      %292 = vmatpush1.msra.mxu0 0.0
      %293 = vmatprep.subr.mxu0 0.0
      %294 = vmatpush1.msra.mxu0 0.0
      %295 = vmatprep.subr.mxu0 0.0
      %296 = vmatpush1.msra.mxu0 0.0
      %297 = vmatprep.subr.mxu0 0.0
      %298 = vmatpush1.msra.mxu0 %v242
      %299 = vmatprep.subr.mxu0 0.0
      %300 = vmatpush2.msra.mxu0 0.0
      %301 = vmatprep.subr.mxu0 0.0
      %302 = vmatpush2.msra.mxu0 0.0
      %303 = vmatprep.subr.mxu0 0.0
      %304 = vmatpush2.msra.mxu0 0.0
      %305 = vmatprep.subr.mxu0 0.0
      %306 = vmatpush2.msra.mxu0 0.0
      %307 = vmatprep.subr.mxu0 0.0
      %308 = vmatpush2.msra.mxu0 0.0
      %309 = vmatprep.subr.mxu0 0.0
      %310 = vmatpush2.msra.mxu0 0.0
      %311 = vmatprep.subr.mxu0 0.0
      %312 = vmatpush2.msra.mxu0 0.0
      %313 = vmatprep.subr.mxu0 0.0
      %314 = vmatpush2.msra.mxu0 0.0
      %315 = vmatprep.subr.mxu0 0.0
      %316 = vmatpush2.msra.mxu0 0.0
      %317 = vmatprep.subr.mxu0 0.0
      %318 = vmatpush2.msra.mxu0 0.0
      %319 = vmatprep.subr.mxu0 0.0
      %320 = vmatpush2.msra.mxu0 0.0
      %321 = vmatprep.subr.mxu0 0.0
      %322 = vmatpush2.msra.mxu0 0.0
      %323 = vmatprep.subr.mxu0 0.0
      %324 = vmatpush2.msra.mxu0 0.0
      %325 = vmatprep.subr.mxu0 0.0
      %326 = vmatpush2.msra.mxu0 0.0
      %327 = vmatprep.subr.mxu0 0.0
      %328 = vmatpush2.msra.mxu0 0.0
      %329 = vmatprep.subr.mxu0 0.0
      %330 = vmatpush2.msra.mxu0 0.0
      %331 = vmatprep.mubr.f32.mxu0 0.0
      %332 = vmatmul.mubr.f32.gmra.mxu0 %v244
      %v333 = vpop.f32.mrf.mxu0
      %v334 = vadd.f32 0.0, %v333
      %v335 = vpop.f32.mrf.mxu0
      %336 = vmatprep.mubr.f32.mxu0 0.0
      %337 = vmatmul.mubr.f32.gmra.mxu0 %v247
      %v338 = vpop.f32.mrf.mxu0
      %v339 = vadd.f32 0.0, %v338
      %v340 = vpop.f32.mrf.mxu0
      %341 = vmatprep.mubr.f32.mxu0 0.0
      %342 = vmatmul.mubr.f32.gmra.mxu0 %v250
      %v343 = vpop.f32.mrf.mxu0
      %v344 = vadd.f32 0.0, %v343
      %v345 = vpop.f32.mrf.mxu0
      %346 = vmatprep.mubr.f32.mxu0 0.0
      %347 = vmatmul.mubr.f32.gmra.mxu0 %v253
      %v348 = vpop.f32.mrf.mxu0
      %v349 = vadd.f32 0.0, %v348
      %v350 = vpop.f32.mrf.mxu0
      %351 = vmatprep.mubr.f32.mxu0 0.0
      %352 = vmatmul.mubr.f32.gmra.mxu0 %v256
      %v353 = vpop.f32.mrf.mxu0
      %v354 = vadd.f32 0.0, %v353
      %v355 = vpop.f32.mrf.mxu0
      %356 = vmatprep.mubr.f32.mxu0 0.0
      %357 = vmatmul.mubr.f32.gmra.mxu0 %v259
      %v358 = vpop.f32.mrf.mxu0
      %v359 = vadd.f32 0.0, %v358
      %v360 = vpop.f32.mrf.mxu0
      %361 = vmatprep.mubr.f32.mxu0 0.0
      %362 = vmatmul.mubr.f32.gmra.mxu0 %v262
      %v363 = vpop.f32.mrf.mxu0
      %v364 = vadd.f32 0.0, %v363
      %v365 = vpop.f32.mrf.mxu0
      %366 = vmatprep.mubr.f32.mxu0 0.0
      %367 = vmatmul.mubr.f32.gmra.mxu0 %v265
      %v368 = vpop.f32.mrf.mxu0
      %v369 = vadd.f32 0.0, %v368
      %v370 = vpop.f32.mrf.mxu0
      %371 = vdwg.mxu0
      %v373 = vsel %vm187, %v224, 0
      %v376 = vsel %vm187, %v225, 0
      %v379 = vsel %vm187, %v226, 0
      %v382 = vsel %vm187, %v227, 0
      %v385 = vsel %vm187, %v228, 0
      %v388 = vsel %vm187, %v229, 0
      %v391 = vsel %vm187, %v230, 0
      %v394 = vsel %vm187, %v231, 0
      %396 = vmatprep.subr.mxu0 0.0
      %397 = vmatpush1.msra.mxu0 0.0
      %398 = vmatprep.subr.mxu0 0.0
      %399 = vmatpush1.msra.mxu0 0.0
      %400 = vmatprep.subr.mxu0 0.0
      %401 = vmatpush1.msra.mxu0 0.0
      %402 = vmatprep.subr.mxu0 0.0
      %403 = vmatpush1.msra.mxu0 0.0
      %404 = vmatprep.subr.mxu0 0.0
      %405 = vmatpush1.msra.mxu0 0.0
      %406 = vmatprep.subr.mxu0 0.0
      %407 = vmatpush1.msra.mxu0 0.0
      %408 = vmatprep.subr.mxu0 0.0
      %409 = vmatpush1.msra.mxu0 0.0
      %410 = vmatprep.subr.mxu0 0.0
      %411 = vmatpush1.msra.mxu0 0.0
      %412 = vmatprep.subr.mxu0 0.0
      %413 = vmatpush1.msra.mxu0 0.0
      %414 = vmatprep.subr.mxu0 0.0
      %415 = vmatpush1.msra.mxu0 0.0
      %416 = vmatprep.subr.mxu0 0.0
      %417 = vmatpush1.msra.mxu0 0.0
      %418 = vmatprep.subr.mxu0 0.0
      %419 = vmatpush1.msra.mxu0 0.0
      %420 = vmatprep.subr.mxu0 0.0
      %421 = vmatpush1.msra.mxu0 0.0
      %422 = vmatprep.subr.mxu0 0.0
      %423 = vmatpush1.msra.mxu0 0.0
      %424 = vmatprep.subr.mxu0 0.0
      %425 = vmatpush1.msra.mxu0 0.0
      %426 = vmatprep.subr.mxu0 0.0
      %427 = vmatpush1.msra.mxu0 %v240
      %428 = vmatprep.subr.mxu0 0.0
      %429 = vmatpush2.msra.mxu0 0.0
      %430 = vmatprep.subr.mxu0 0.0
      %431 = vmatpush2.msra.mxu0 0.0
      %432 = vmatprep.subr.mxu0 0.0
      %433 = vmatpush2.msra.mxu0 0.0
      %434 = vmatprep.subr.mxu0 0.0
      %435 = vmatpush2.msra.mxu0 0.0
      %436 = vmatprep.subr.mxu0 0.0
      %437 = vmatpush2.msra.mxu0 0.0
      %438 = vmatprep.subr.mxu0 0.0
      %439 = vmatpush2.msra.mxu0 0.0
      %440 = vmatprep.subr.mxu0 0.0
      %441 = vmatpush2.msra.mxu0 0.0
      %442 = vmatprep.subr.mxu0 0.0
      %443 = vmatpush2.msra.mxu0 0.0
      %444 = vmatprep.subr.mxu0 0.0
      %445 = vmatpush2.msra.mxu0 0.0
      %446 = vmatprep.subr.mxu0 0.0
      %447 = vmatpush2.msra.mxu0 0.0
      %448 = vmatprep.subr.mxu0 0.0
      %449 = vmatpush2.msra.mxu0 0.0
      %450 = vmatprep.subr.mxu0 0.0
      %451 = vmatpush2.msra.mxu0 0.0
      %452 = vmatprep.subr.mxu0 0.0
      %453 = vmatpush2.msra.mxu0 0.0
      %454 = vmatprep.subr.mxu0 0.0
      %455 = vmatpush2.msra.mxu0 0.0
      %456 = vmatprep.subr.mxu0 0.0
      %457 = vmatpush2.msra.mxu0 0.0
      %458 = vmatprep.subr.mxu0 0.0
      %459 = vmatpush2.msra.mxu0 0.0
      %460 = vmatprep.mubr.f32.mxu0 0.0
      %461 = vmatmul.mubr.f32.gmra.mxu0 %v373
      %v462 = vpop.f32.mrf.mxu0
      %v463 = vadd.f32 %v334, %v462
      %v464 = vpop.f32.mrf.mxu0
      %465 = vmatprep.mubr.f32.mxu0 0.0
      %466 = vmatmul.mubr.f32.gmra.mxu0 %v376
      %v467 = vpop.f32.mrf.mxu0
      %v468 = vadd.f32 %v339, %v467
      %v469 = vpop.f32.mrf.mxu0
      %470 = vmatprep.mubr.f32.mxu0 0.0
      %471 = vmatmul.mubr.f32.gmra.mxu0 %v379
      %v472 = vpop.f32.mrf.mxu0
      %v473 = vadd.f32 %v344, %v472
      %v474 = vpop.f32.mrf.mxu0
      %475 = vmatprep.mubr.f32.mxu0 0.0
      %476 = vmatmul.mubr.f32.gmra.mxu0 %v382
      %v477 = vpop.f32.mrf.mxu0
      %v478 = vadd.f32 %v349, %v477
      %v479 = vpop.f32.mrf.mxu0
      %480 = vmatprep.mubr.f32.mxu0 0.0
      %481 = vmatmul.mubr.f32.gmra.mxu0 %v385
      %v482 = vpop.f32.mrf.mxu0
      %v483 = vadd.f32 %v354, %v482
      %v484 = vpop.f32.mrf.mxu0
      %485 = vmatprep.mubr.f32.mxu0 0.0
      %486 = vmatmul.mubr.f32.gmra.mxu0 %v388
      %v487 = vpop.f32.mrf.mxu0
      %v488 = vadd.f32 %v359, %v487
      %v489 = vpop.f32.mrf.mxu0
      %490 = vmatprep.mubr.f32.mxu0 0.0
      %491 = vmatmul.mubr.f32.gmra.mxu0 %v391
      %v492 = vpop.f32.mrf.mxu0
      %v493 = vadd.f32 %v364, %v492
      %v494 = vpop.f32.mrf.mxu0
      %495 = vmatprep.mubr.f32.mxu0 0.0
      %496 = vmatmul.mubr.f32.gmra.mxu0 %v394
      %v497 = vpop.f32.mrf.mxu0
      %v498 = vadd.f32 %v369, %v497
      %v499 = vpop.f32.mrf.mxu0
      %500 = vdwg.mxu0
      %s501 = scalar_lea.vmem [#allocation2], 16
      %v502 = vld [vmem:[%s501] sm:$0xff]
      %v503 = vld [vmem:[%s501 + $0x20] sm:$0xff]
      %v504 = vld [vmem:[%s501 + $0x40] sm:$0xff]
      %v505 = vld [vmem:[%s501 + $0x60] sm:$0xff]
      %v506 = vld [vmem:[%s501 + $0x80] sm:$0xff]
      %v507 = vld [vmem:[%s501 + $0xa0] sm:$0xff]
      %v508 = vld [vmem:[%s501 + $0xc0] sm:$0xff]
      %v509 = vld [vmem:[%s501 + $0xe0] sm:$0xff]
      %v510 = vld [vmem:[%s501 + $0x1] sm:$0xff]
      %v511 = vld [vmem:[%s501 + $0x21] sm:$0xff]
      %v512 = vld [vmem:[%s501 + $0x41] sm:$0xff]
      %v513 = vld [vmem:[%s501 + $0x61] sm:$0xff]
      %v514 = vld [vmem:[%s501 + $0x81] sm:$0xff]
      %v515 = vld [vmem:[%s501 + $0xa1] sm:$0xff]
      %v516 = vld [vmem:[%s501 + $0xc1] sm:$0xff]
      %v517 = vld [vmem:[%s501 + $0xe1] sm:$0xff]
      %s518 = scalar_lea.vmem %s1, 16
      %v519 = vld [vmem:[%s518] sm:$0xff]
      %v521 = vsel %vm187, %v502, 0
      %v524 = vsel %vm187, %v503, 0
      %v527 = vsel %vm187, %v504, 0
      %v530 = vsel %vm187, %v505, 0
      %v533 = vsel %vm187, %v506, 0
      %v536 = vsel %vm187, %v507, 0
      %v539 = vsel %vm187, %v508, 0
      %v542 = vsel %vm187, %v509, 0
      %544 = vmatprep.subr.mxu0 0.0
      %545 = vmatpush1.msra.mxu0 0.0
      %546 = vmatprep.subr.mxu0 0.0
      %547 = vmatpush1.msra.mxu0 0.0
      %548 = vmatprep.subr.mxu0 0.0
      %549 = vmatpush1.msra.mxu0 0.0
      %550 = vmatprep.subr.mxu0 0.0
      %551 = vmatpush1.msra.mxu0 0.0
      %552 = vmatprep.subr.mxu0 0.0
      %553 = vmatpush1.msra.mxu0 0.0
      %554 = vmatprep.subr.mxu0 0.0
      %555 = vmatpush1.msra.mxu0 0.0
      %556 = vmatprep.subr.mxu0 0.0
      %557 = vmatpush1.msra.mxu0 0.0
      %558 = vmatprep.subr.mxu0 0.0
      %559 = vmatpush1.msra.mxu0 0.0
      %560 = vmatprep.subr.mxu0 0.0
      %561 = vmatpush1.msra.mxu0 0.0
      %562 = vmatprep.subr.mxu0 0.0
      %563 = vmatpush1.msra.mxu0 0.0
      %564 = vmatprep.subr.mxu0 0.0
      %565 = vmatpush1.msra.mxu0 0.0
      %566 = vmatprep.subr.mxu0 0.0
      %567 = vmatpush1.msra.mxu0 0.0
      %568 = vmatprep.subr.mxu0 0.0
      %569 = vmatpush1.msra.mxu0 0.0
      %570 = vmatprep.subr.mxu0 0.0
      %571 = vmatpush1.msra.mxu0 0.0
      %572 = vmatprep.subr.mxu0 0.0
      %573 = vmatpush1.msra.mxu0 0.0
      %574 = vmatprep.subr.mxu0 0.0
      %575 = vmatpush1.msra.mxu0 %v519
      %576 = vmatprep.subr.mxu0 0.0
      %577 = vmatpush2.msra.mxu0 0.0
      %578 = vmatprep.subr.mxu0 0.0
      %579 = vmatpush2.msra.mxu0 0.0
      %580 = vmatprep.subr.mxu0 0.0
      %581 = vmatpush2.msra.mxu0 0.0
      %582 = vmatprep.subr.mxu0 0.0
      %583 = vmatpush2.msra.mxu0 0.0
      %584 = vmatprep.subr.mxu0 0.0
      %585 = vmatpush2.msra.mxu0 0.0
      %586 = vmatprep.subr.mxu0 0.0
      %587 = vmatpush2.msra.mxu0 0.0
      %588 = vmatprep.subr.mxu0 0.0
      %589 = vmatpush2.msra.mxu0 0.0
      %590 = vmatprep.subr.mxu0 0.0
      %591 = vmatpush2.msra.mxu0 0.0
      %592 = vmatprep.subr.mxu0 0.0
      %593 = vmatpush2.msra.mxu0 0.0
      %594 = vmatprep.subr.mxu0 0.0
      %595 = vmatpush2.msra.mxu0 0.0
      %596 = vmatprep.subr.mxu0 0.0
      %597 = vmatpush2.msra.mxu0 0.0
      %598 = vmatprep.subr.mxu0 0.0
      %599 = vmatpush2.msra.mxu0 0.0
      %600 = vmatprep.subr.mxu0 0.0
      %601 = vmatpush2.msra.mxu0 0.0
      %602 = vmatprep.subr.mxu0 0.0
      %603 = vmatpush2.msra.mxu0 0.0
      %604 = vmatprep.subr.mxu0 0.0
      %605 = vmatpush2.msra.mxu0 0.0
      %606 = vmatprep.subr.mxu0 0.0
      %607 = vmatpush2.msra.mxu0 0.0
      %608 = vmatprep.mubr.f32.mxu0 0.0
      %609 = vmatmul.mubr.f32.gmra.mxu0 %v521
      %v610 = vpop.f32.mrf.mxu0
      %v611 = vadd.f32 0.0, %v610
      %v612 = vpop.f32.mrf.mxu0
      %613 = vmatprep.mubr.f32.mxu0 0.0
      %614 = vmatmul.mubr.f32.gmra.mxu0 %v524
      %v615 = vpop.f32.mrf.mxu0
      %v616 = vadd.f32 0.0, %v615
      %v617 = vpop.f32.mrf.mxu0
      %618 = vmatprep.mubr.f32.mxu0 0.0
      %619 = vmatmul.mubr.f32.gmra.mxu0 %v527
      %v620 = vpop.f32.mrf.mxu0
      %v621 = vadd.f32 0.0, %v620
      %v622 = vpop.f32.mrf.mxu0
      %623 = vmatprep.mubr.f32.mxu0 0.0
      %624 = vmatmul.mubr.f32.gmra.mxu0 %v530
      %v625 = vpop.f32.mrf.mxu0
      %v626 = vadd.f32 0.0, %v625
      %v627 = vpop.f32.mrf.mxu0
      %628 = vmatprep.mubr.f32.mxu0 0.0
      %629 = vmatmul.mubr.f32.gmra.mxu0 %v533
      %v630 = vpop.f32.mrf.mxu0
      %v631 = vadd.f32 0.0, %v630
      %v632 = vpop.f32.mrf.mxu0
      %633 = vmatprep.mubr.f32.mxu0 0.0
      %634 = vmatmul.mubr.f32.gmra.mxu0 %v536
      %v635 = vpop.f32.mrf.mxu0
      %v636 = vadd.f32 0.0, %v635
      %v637 = vpop.f32.mrf.mxu0
      %638 = vmatprep.mubr.f32.mxu0 0.0
      %639 = vmatmul.mubr.f32.gmra.mxu0 %v539
      %v640 = vpop.f32.mrf.mxu0
      %v641 = vadd.f32 0.0, %v640
      %v642 = vpop.f32.mrf.mxu0
      %643 = vmatprep.mubr.f32.mxu0 0.0
      %644 = vmatmul.mubr.f32.gmra.mxu0 %v542
      %v645 = vpop.f32.mrf.mxu0
      %v646 = vadd.f32 0.0, %v645
      %v647 = vpop.f32.mrf.mxu0
      %648 = vdwg.mxu0
      %s649 = scalar_lea.vmem %s1, 24
      %v650 = vld [vmem:[%s649] sm:$0xff]
      %v652 = vsel %vm187, %v510, 0
      %v655 = vsel %vm187, %v511, 0
      %v658 = vsel %vm187, %v512, 0
      %v661 = vsel %vm187, %v513, 0
      %v664 = vsel %vm187, %v514, 0
      %v667 = vsel %vm187, %v515, 0
      %v670 = vsel %vm187, %v516, 0
      %v673 = vsel %vm187, %v517, 0
      %675 = vmatprep.subr.mxu0 0.0
      %676 = vmatpush1.msra.mxu0 0.0
      %677 = vmatprep.subr.mxu0 0.0
      %678 = vmatpush1.msra.mxu0 0.0
      %679 = vmatprep.subr.mxu0 0.0
      %680 = vmatpush1.msra.mxu0 0.0
      %681 = vmatprep.subr.mxu0 0.0
      %682 = vmatpush1.msra.mxu0 0.0
      %683 = vmatprep.subr.mxu0 0.0
      %684 = vmatpush1.msra.mxu0 0.0
      %685 = vmatprep.subr.mxu0 0.0
      %686 = vmatpush1.msra.mxu0 0.0
      %687 = vmatprep.subr.mxu0 0.0
      %688 = vmatpush1.msra.mxu0 0.0
      %689 = vmatprep.subr.mxu0 0.0
      %690 = vmatpush1.msra.mxu0 0.0
      %691 = vmatprep.subr.mxu0 0.0
      %692 = vmatpush1.msra.mxu0 0.0
      %693 = vmatprep.subr.mxu0 0.0
      %694 = vmatpush1.msra.mxu0 0.0
      %695 = vmatprep.subr.mxu0 0.0
      %696 = vmatpush1.msra.mxu0 0.0
      %697 = vmatprep.subr.mxu0 0.0
      %698 = vmatpush1.msra.mxu0 0.0
      %699 = vmatprep.subr.mxu0 0.0
      %700 = vmatpush1.msra.mxu0 0.0
      %701 = vmatprep.subr.mxu0 0.0
      %702 = vmatpush1.msra.mxu0 0.0
      %703 = vmatprep.subr.mxu0 0.0
      %704 = vmatpush1.msra.mxu0 0.0
      %705 = vmatprep.subr.mxu0 0.0
      %706 = vmatpush1.msra.mxu0 %v650
      %707 = vmatprep.subr.mxu0 0.0
      %708 = vmatpush2.msra.mxu0 0.0
      %709 = vmatprep.subr.mxu0 0.0
      %710 = vmatpush2.msra.mxu0 0.0
      %711 = vmatprep.subr.mxu0 0.0
      %712 = vmatpush2.msra.mxu0 0.0
      %713 = vmatprep.subr.mxu0 0.0
      %714 = vmatpush2.msra.mxu0 0.0
      %715 = vmatprep.subr.mxu0 0.0
      %716 = vmatpush2.msra.mxu0 0.0
      %717 = vmatprep.subr.mxu0 0.0
      %718 = vmatpush2.msra.mxu0 0.0
      %719 = vmatprep.subr.mxu0 0.0
      %720 = vmatpush2.msra.mxu0 0.0
      %721 = vmatprep.subr.mxu0 0.0
      %722 = vmatpush2.msra.mxu0 0.0
      %723 = vmatprep.subr.mxu0 0.0
      %724 = vmatpush2.msra.mxu0 0.0
      %725 = vmatprep.subr.mxu0 0.0
      %726 = vmatpush2.msra.mxu0 0.0
      %727 = vmatprep.subr.mxu0 0.0
      %728 = vmatpush2.msra.mxu0 0.0
      %729 = vmatprep.subr.mxu0 0.0
      %730 = vmatpush2.msra.mxu0 0.0
      %731 = vmatprep.subr.mxu0 0.0
      %732 = vmatpush2.msra.mxu0 0.0
      %733 = vmatprep.subr.mxu0 0.0
      %734 = vmatpush2.msra.mxu0 0.0
      %735 = vmatprep.subr.mxu0 0.0
      %736 = vmatpush2.msra.mxu0 0.0
      %737 = vmatprep.subr.mxu0 0.0
      %738 = vmatpush2.msra.mxu0 0.0
      %739 = vmatprep.mubr.f32.mxu0 0.0
      %740 = vmatmul.mubr.f32.gmra.mxu0 %v652
      %v741 = vpop.f32.mrf.mxu0
      %v742 = vadd.f32 0.0, %v741
      %v743 = vpop.f32.mrf.mxu0
      %744 = vmatprep.mubr.f32.mxu0 0.0
      %745 = vmatmul.mubr.f32.gmra.mxu0 %v655
      %v746 = vpop.f32.mrf.mxu0
      %v747 = vadd.f32 0.0, %v746
      %v748 = vpop.f32.mrf.mxu0
      %749 = vmatprep.mubr.f32.mxu0 0.0
      %750 = vmatmul.mubr.f32.gmra.mxu0 %v658
      %v751 = vpop.f32.mrf.mxu0
      %v752 = vadd.f32 0.0, %v751
      %v753 = vpop.f32.mrf.mxu0
      %754 = vmatprep.mubr.f32.mxu0 0.0
      %755 = vmatmul.mubr.f32.gmra.mxu0 %v661
      %v756 = vpop.f32.mrf.mxu0
      %v757 = vadd.f32 0.0, %v756
      %v758 = vpop.f32.mrf.mxu0
      %759 = vmatprep.mubr.f32.mxu0 0.0
      %760 = vmatmul.mubr.f32.gmra.mxu0 %v664
      %v761 = vpop.f32.mrf.mxu0
      %v762 = vadd.f32 0.0, %v761
      %v763 = vpop.f32.mrf.mxu0
      %764 = vmatprep.mubr.f32.mxu0 0.0
      %765 = vmatmul.mubr.f32.gmra.mxu0 %v667
      %v766 = vpop.f32.mrf.mxu0
      %v767 = vadd.f32 0.0, %v766
      %v768 = vpop.f32.mrf.mxu0
      %769 = vmatprep.mubr.f32.mxu0 0.0
      %770 = vmatmul.mubr.f32.gmra.mxu0 %v670
      %v771 = vpop.f32.mrf.mxu0
      %v772 = vadd.f32 0.0, %v771
      %v773 = vpop.f32.mrf.mxu0
      %774 = vmatprep.mubr.f32.mxu0 0.0
      %775 = vmatmul.mubr.f32.gmra.mxu0 %v673
      %v776 = vpop.f32.mrf.mxu0
      %v777 = vadd.f32 0.0, %v776
      %v778 = vpop.f32.mrf.mxu0
      %779 = vdwg.mxu0
      %v780 = vadd.f32 %v463, %v611
      %v781 = vadd.f32 %v468, %v616
      %v782 = vadd.f32 %v473, %v621
      %v783 = vadd.f32 %v478, %v626
      %v784 = vadd.f32 %v483, %v631
      %v785 = vadd.f32 %v488, %v636
      %v786 = vadd.f32 %v493, %v641
      %v787 = vadd.f32 %v498, %v646
      %v788 = vadd.f32 %v780, %v742
      %v789 = vadd.f32 %v781, %v747
      %v790 = vadd.f32 %v782, %v752
      %v791 = vadd.f32 %v783, %v757
      %v792 = vadd.f32 %v784, %v762
      %v793 = vadd.f32 %v785, %v767
      %v794 = vadd.f32 %v786, %v772
      %v795 = vadd.f32 %v787, %v777
      %s796 = scalar_lea.vmem [#allocation2], 32
      %v797 = vld [vmem:[%s796] sm:$0xff]
      %v798 = vld [vmem:[%s796 + $0x20] sm:$0xff]
      %v799 = vld [vmem:[%s796 + $0x40] sm:$0xff]
      %v800 = vld [vmem:[%s796 + $0x60] sm:$0xff]
      %v801 = vld [vmem:[%s796 + $0x80] sm:$0xff]
      %v802 = vld [vmem:[%s796 + $0xa0] sm:$0xff]
      %v803 = vld [vmem:[%s796 + $0xc0] sm:$0xff]
      %v804 = vld [vmem:[%s796 + $0xe0] sm:$0xff]
      %v805 = vld [vmem:[%s796 + $0x1] sm:$0xff]
      %v806 = vld [vmem:[%s796 + $0x21] sm:$0xff]
      %v807 = vld [vmem:[%s796 + $0x41] sm:$0xff]
      %v808 = vld [vmem:[%s796 + $0x61] sm:$0xff]
      %v809 = vld [vmem:[%s796 + $0x81] sm:$0xff]
      %v810 = vld [vmem:[%s796 + $0xa1] sm:$0xff]
      %v811 = vld [vmem:[%s796 + $0xc1] sm:$0xff]
      %v812 = vld [vmem:[%s796 + $0xe1] sm:$0xff]
      %s813 = scalar_lea.vmem %s1, 32
      %v814 = vld [vmem:[%s813] sm:$0xff]
      %v816 = vsel %vm187, %v797, 0
      %v819 = vsel %vm187, %v798, 0
      %v822 = vsel %vm187, %v799, 0
      %v825 = vsel %vm187, %v800, 0
      %v828 = vsel %vm187, %v801, 0
      %v831 = vsel %vm187, %v802, 0
      %v834 = vsel %vm187, %v803, 0
      %v837 = vsel %vm187, %v804, 0
      %839 = vmatprep.subr.mxu0 0.0
      %840 = vmatpush1.msra.mxu0 0.0
      %841 = vmatprep.subr.mxu0 0.0
      %842 = vmatpush1.msra.mxu0 0.0
      %843 = vmatprep.subr.mxu0 0.0
      %844 = vmatpush1.msra.mxu0 0.0
      %845 = vmatprep.subr.mxu0 0.0
      %846 = vmatpush1.msra.mxu0 0.0
      %847 = vmatprep.subr.mxu0 0.0
      %848 = vmatpush1.msra.mxu0 0.0
      %849 = vmatprep.subr.mxu0 0.0
      %850 = vmatpush1.msra.mxu0 0.0
      %851 = vmatprep.subr.mxu0 0.0
      %852 = vmatpush1.msra.mxu0 0.0
      %853 = vmatprep.subr.mxu0 0.0
      %854 = vmatpush1.msra.mxu0 0.0
      %855 = vmatprep.subr.mxu0 0.0
      %856 = vmatpush1.msra.mxu0 0.0
      %857 = vmatprep.subr.mxu0 0.0
      %858 = vmatpush1.msra.mxu0 0.0
      %859 = vmatprep.subr.mxu0 0.0
      %860 = vmatpush1.msra.mxu0 0.0
      %861 = vmatprep.subr.mxu0 0.0
      %862 = vmatpush1.msra.mxu0 0.0
      %863 = vmatprep.subr.mxu0 0.0
      %864 = vmatpush1.msra.mxu0 0.0
      %865 = vmatprep.subr.mxu0 0.0
      %866 = vmatpush1.msra.mxu0 0.0
      %867 = vmatprep.subr.mxu0 0.0
      %868 = vmatpush1.msra.mxu0 0.0
      %869 = vmatprep.subr.mxu0 0.0
      %870 = vmatpush1.msra.mxu0 %v814
      %871 = vmatprep.subr.mxu0 0.0
      %872 = vmatpush2.msra.mxu0 0.0
      %873 = vmatprep.subr.mxu0 0.0
      %874 = vmatpush2.msra.mxu0 0.0
      %875 = vmatprep.subr.mxu0 0.0
      %876 = vmatpush2.msra.mxu0 0.0
      %877 = vmatprep.subr.mxu0 0.0
      %878 = vmatpush2.msra.mxu0 0.0
      %879 = vmatprep.subr.mxu0 0.0
      %880 = vmatpush2.msra.mxu0 0.0
      %881 = vmatprep.subr.mxu0 0.0
      %882 = vmatpush2.msra.mxu0 0.0
      %883 = vmatprep.subr.mxu0 0.0
      %884 = vmatpush2.msra.mxu0 0.0
      %885 = vmatprep.subr.mxu0 0.0
      %886 = vmatpush2.msra.mxu0 0.0
      %887 = vmatprep.subr.mxu0 0.0
      %888 = vmatpush2.msra.mxu0 0.0
      %889 = vmatprep.subr.mxu0 0.0
      %890 = vmatpush2.msra.mxu0 0.0
      %891 = vmatprep.subr.mxu0 0.0
      %892 = vmatpush2.msra.mxu0 0.0
      %893 = vmatprep.subr.mxu0 0.0
      %894 = vmatpush2.msra.mxu0 0.0
      %895 = vmatprep.subr.mxu0 0.0
      %896 = vmatpush2.msra.mxu0 0.0
      %897 = vmatprep.subr.mxu0 0.0
      %898 = vmatpush2.msra.mxu0 0.0
      %899 = vmatprep.subr.mxu0 0.0
      %900 = vmatpush2.msra.mxu0 0.0
      %901 = vmatprep.subr.mxu0 0.0
      %902 = vmatpush2.msra.mxu0 0.0
      %903 = vmatprep.mubr.f32.mxu0 0.0
      %904 = vmatmul.mubr.f32.gmra.mxu0 %v816
      %v905 = vpop.f32.mrf.mxu0
      %v906 = vadd.f32 0.0, %v905
      %v907 = vpop.f32.mrf.mxu0
      %908 = vmatprep.mubr.f32.mxu0 0.0
      %909 = vmatmul.mubr.f32.gmra.mxu0 %v819
      %v910 = vpop.f32.mrf.mxu0
      %v911 = vadd.f32 0.0, %v910
      %v912 = vpop.f32.mrf.mxu0
      %913 = vmatprep.mubr.f32.mxu0 0.0
      %914 = vmatmul.mubr.f32.gmra.mxu0 %v822
      %v915 = vpop.f32.mrf.mxu0
      %v916 = vadd.f32 0.0, %v915
      %v917 = vpop.f32.mrf.mxu0
      %918 = vmatprep.mubr.f32.mxu0 0.0
      %919 = vmatmul.mubr.f32.gmra.mxu0 %v825
      %v920 = vpop.f32.mrf.mxu0
      %v921 = vadd.f32 0.0, %v920
      %v922 = vpop.f32.mrf.mxu0
      %923 = vmatprep.mubr.f32.mxu0 0.0
      %924 = vmatmul.mubr.f32.gmra.mxu0 %v828
      %v925 = vpop.f32.mrf.mxu0
      %v926 = vadd.f32 0.0, %v925
      %v927 = vpop.f32.mrf.mxu0
      %928 = vmatprep.mubr.f32.mxu0 0.0
      %929 = vmatmul.mubr.f32.gmra.mxu0 %v831
      %v930 = vpop.f32.mrf.mxu0
      %v931 = vadd.f32 0.0, %v930
      %v932 = vpop.f32.mrf.mxu0
      %933 = vmatprep.mubr.f32.mxu0 0.0
      %934 = vmatmul.mubr.f32.gmra.mxu0 %v834
      %v935 = vpop.f32.mrf.mxu0
      %v936 = vadd.f32 0.0, %v935
      %v937 = vpop.f32.mrf.mxu0
      %938 = vmatprep.mubr.f32.mxu0 0.0
      %939 = vmatmul.mubr.f32.gmra.mxu0 %v837
      %v940 = vpop.f32.mrf.mxu0
      %v941 = vadd.f32 0.0, %v940
      %v942 = vpop.f32.mrf.mxu0
      %943 = vdwg.mxu0
      %s944 = scalar_lea.vmem %s1, 40
      %v945 = vld [vmem:[%s944] sm:$0xff]
      %v947 = vsel %vm187, %v805, 0
      %v950 = vsel %vm187, %v806, 0
      %v953 = vsel %vm187, %v807, 0
      %v956 = vsel %vm187, %v808, 0
      %v959 = vsel %vm187, %v809, 0
      %v962 = vsel %vm187, %v810, 0
      %v965 = vsel %vm187, %v811, 0
      %v968 = vsel %vm187, %v812, 0
      %970 = vmatprep.subr.mxu0 0.0
      %971 = vmatpush1.msra.mxu0 0.0
      %972 = vmatprep.subr.mxu0 0.0
      %973 = vmatpush1.msra.mxu0 0.0
      %974 = vmatprep.subr.mxu0 0.0
      %975 = vmatpush1.msra.mxu0 0.0
      %976 = vmatprep.subr.mxu0 0.0
      %977 = vmatpush1.msra.mxu0 0.0
      %978 = vmatprep.subr.mxu0 0.0
      %979 = vmatpush1.msra.mxu0 0.0
      %980 = vmatprep.subr.mxu0 0.0
      %981 = vmatpush1.msra.mxu0 0.0
      %982 = vmatprep.subr.mxu0 0.0
      %983 = vmatpush1.msra.mxu0 0.0
      %984 = vmatprep.subr.mxu0 0.0
      %985 = vmatpush1.msra.mxu0 0.0
      %986 = vmatprep.subr.mxu0 0.0
      %987 = vmatpush1.msra.mxu0 0.0
      %988 = vmatprep.subr.mxu0 0.0
      %989 = vmatpush1.msra.mxu0 0.0
      %990 = vmatprep.subr.mxu0 0.0
      %991 = vmatpush1.msra.mxu0 0.0
      %992 = vmatprep.subr.mxu0 0.0
      %993 = vmatpush1.msra.mxu0 0.0
      %994 = vmatprep.subr.mxu0 0.0
      %995 = vmatpush1.msra.mxu0 0.0
      %996 = vmatprep.subr.mxu0 0.0
      %997 = vmatpush1.msra.mxu0 0.0
      %998 = vmatprep.subr.mxu0 0.0
      %999 = vmatpush1.msra.mxu0 0.0
      %1000 = vmatprep.subr.mxu0 0.0
      %1001 = vmatpush1.msra.mxu0 %v945
      %1002 = vmatprep.subr.mxu0 0.0
      %1003 = vmatpush2.msra.mxu0 0.0
      %1004 = vmatprep.subr.mxu0 0.0
      %1005 = vmatpush2.msra.mxu0 0.0
      %1006 = vmatprep.subr.mxu0 0.0
      %1007 = vmatpush2.msra.mxu0 0.0
      %1008 = vmatprep.subr.mxu0 0.0
      %1009 = vmatpush2.msra.mxu0 0.0
      %1010 = vmatprep.subr.mxu0 0.0
      %1011 = vmatpush2.msra.mxu0 0.0
      %1012 = vmatprep.subr.mxu0 0.0
      %1013 = vmatpush2.msra.mxu0 0.0
      %1014 = vmatprep.subr.mxu0 0.0
      %1015 = vmatpush2.msra.mxu0 0.0
      %1016 = vmatprep.subr.mxu0 0.0
      %1017 = vmatpush2.msra.mxu0 0.0
      %1018 = vmatprep.subr.mxu0 0.0
      %1019 = vmatpush2.msra.mxu0 0.0
      %1020 = vmatprep.subr.mxu0 0.0
      %1021 = vmatpush2.msra.mxu0 0.0
      %1022 = vmatprep.subr.mxu0 0.0
      %1023 = vmatpush2.msra.mxu0 0.0
      %1024 = vmatprep.subr.mxu0 0.0
      %1025 = vmatpush2.msra.mxu0 0.0
      %1026 = vmatprep.subr.mxu0 0.0
      %1027 = vmatpush2.msra.mxu0 0.0
      %1028 = vmatprep.subr.mxu0 0.0
      %1029 = vmatpush2.msra.mxu0 0.0
      %1030 = vmatprep.subr.mxu0 0.0
      %1031 = vmatpush2.msra.mxu0 0.0
      %1032 = vmatprep.subr.mxu0 0.0
      %1033 = vmatpush2.msra.mxu0 0.0
      %1034 = vmatprep.mubr.f32.mxu0 0.0
      %1035 = vmatmul.mubr.f32.gmra.mxu0 %v947
      %v1036 = vpop.f32.mrf.mxu0
      %v1037 = vadd.f32 0.0, %v1036
      %v1038 = vpop.f32.mrf.mxu0
      %1039 = vmatprep.mubr.f32.mxu0 0.0
      %1040 = vmatmul.mubr.f32.gmra.mxu0 %v950
      %v1041 = vpop.f32.mrf.mxu0
      %v1042 = vadd.f32 0.0, %v1041
      %v1043 = vpop.f32.mrf.mxu0
      %1044 = vmatprep.mubr.f32.mxu0 0.0
      %1045 = vmatmul.mubr.f32.gmra.mxu0 %v953
      %v1046 = vpop.f32.mrf.mxu0
      %v1047 = vadd.f32 0.0, %v1046
      %v1048 = vpop.f32.mrf.mxu0
      %1049 = vmatprep.mubr.f32.mxu0 0.0
      %1050 = vmatmul.mubr.f32.gmra.mxu0 %v956
      %v1051 = vpop.f32.mrf.mxu0
      %v1052 = vadd.f32 0.0, %v1051
      %v1053 = vpop.f32.mrf.mxu0
      %1054 = vmatprep.mubr.f32.mxu0 0.0
      %1055 = vmatmul.mubr.f32.gmra.mxu0 %v959
      %v1056 = vpop.f32.mrf.mxu0
      %v1057 = vadd.f32 0.0, %v1056
      %v1058 = vpop.f32.mrf.mxu0
      %1059 = vmatprep.mubr.f32.mxu0 0.0
      %1060 = vmatmul.mubr.f32.gmra.mxu0 %v962
      %v1061 = vpop.f32.mrf.mxu0
      %v1062 = vadd.f32 0.0, %v1061
      %v1063 = vpop.f32.mrf.mxu0
      %1064 = vmatprep.mubr.f32.mxu0 0.0
      %1065 = vmatmul.mubr.f32.gmra.mxu0 %v965
      %v1066 = vpop.f32.mrf.mxu0
      %v1067 = vadd.f32 0.0, %v1066
      %v1068 = vpop.f32.mrf.mxu0
      %1069 = vmatprep.mubr.f32.mxu0 0.0
      %1070 = vmatmul.mubr.f32.gmra.mxu0 %v968
      %v1071 = vpop.f32.mrf.mxu0
      %v1072 = vadd.f32 0.0, %v1071
      %v1073 = vpop.f32.mrf.mxu0
      %1074 = vdwg.mxu0
      %v1075 = vadd.f32 %v788, %v906
      %v1076 = vadd.f32 %v789, %v911
      %v1077 = vadd.f32 %v790, %v916
      %v1078 = vadd.f32 %v791, %v921
      %v1079 = vadd.f32 %v792, %v926
      %v1080 = vadd.f32 %v793, %v931
      %v1081 = vadd.f32 %v794, %v936
      %v1082 = vadd.f32 %v795, %v941
      %v1083 = vadd.f32 %v1075, %v1037
      %v1084 = vadd.f32 %v1076, %v1042
      %v1085 = vadd.f32 %v1077, %v1047
      %v1086 = vadd.f32 %v1078, %v1052
      %v1087 = vadd.f32 %v1079, %v1057
      %v1088 = vadd.f32 %v1080, %v1062
      %v1089 = vadd.f32 %v1081, %v1067
      %v1090 = vadd.f32 %v1082, %v1072
      %v1091 = vld [vmem:[%s2] sm:$0x1]
      %v1093 = vlaneseq
      %v1094 = vshrl.u32 %v1093, 7
      %v1095 = vsub.s32 0, %v1094
      %v1096 = vrot.slane %v1091, %v1095
      %v1098 = vadd.f32 %v1083, %v1096
      %v1099 = vadd.f32 %v1084, %v1096
      %v1100 = vadd.f32 %v1085, %v1096
      %v1101 = vadd.f32 %v1086, %v1096
      %v1102 = vadd.f32 %v1087, %v1096
      %v1103 = vadd.f32 %v1088, %v1096
      %v1104 = vadd.f32 %v1089, %v1096
      %v1105 = vadd.f32 %v1090, %v1096
      %vm1106 = vcmask 31744
      %1107 = vst.msk [vmem:[%s170] sm:$0xff] %vm1106, %v1098
      %1108 = vst.msk [vmem:[%s170 + $0x8] sm:$0xff] %vm1106, %v1099
      %1109 = vst.msk [vmem:[%s170 + $0x10] sm:$0xff] %vm1106, %v1100
      %1110 = vst.msk [vmem:[%s170 + $0x18] sm:$0xff] %vm1106, %v1101
      %1111 = vst.msk [vmem:[%s170 + $0x20] sm:$0xff] %vm1106, %v1102
      %1112 = vst.msk [vmem:[%s170 + $0x28] sm:$0xff] %vm1106, %v1103
      %1113 = vst.msk [vmem:[%s170 + $0x30] sm:$0xff] %vm1106, %v1104
      %1114 = vst.msk [vmem:[%s170 + $0x38] sm:$0xff] %vm1106, %v1105
      %p1115 = scmp.lt.s32.totalorder %s14, 1
      %s1116 = scalar_select %p1115, %s14, 1
      %s1117 = smul.addr %s1116, 8
      %s1118 = smul.addr %s1117, 8
      %s1119 = scalar_lea.vmem %s3, %s1118
      // Predicated region
      $region33: #{tpu_custom_call.1} parent=31 // pred_check
        %p1120 = pneg %p100
      $region34: #{tpu_custom_call.1} parent=31 // pred_check_branch
        %1122 = sbr.rel (%p1120) target = $region36
      $region35: #{tpu_custom_call.1} parent=31 // pred_region
        _
      $region36: #{tpu_custom_call.1} parent=31 // pred_fallthru
        _
    $region32: #{tpu_custom_call.1} parent=5 // pred_fallthru
      _
    %p1123 = scmp.le.s32.totalorder 2, %s9
    // Predicated region
    $region37: #{tpu_custom_call.1} parent=5 // pred_check
      %p1124 = pneg %p1123
    $region38: #{tpu_custom_call.1} parent=5 // pred_check_branch
      %1126 = sbr.rel (%p1124) target = $region40
    $region39: #{tpu_custom_call.1} parent=5 // pred_region
      %s1127 = ssub.s32 %s9, 2
      // Predicated region
      $region41: #{tpu_custom_call.1} parent=39 // pred_check
        %p1128 = pneg %p106
      $region42: #{tpu_custom_call.1} parent=39 // pred_check_branch
        %1130 = sbr.rel (%p1128) target = $region44
      $region43: #{tpu_custom_call.1} parent=39 // pred_region
        %p1131 = scmp.lt.s32.totalorder %s15, 1
        %s1132 = scalar_select %p1131, %s15, 1
        %s1133 = smul.addr %s1132, 8
        %s1134 = smul.addr %s1133, 8
        %s1135 = scalar_lea.vmem %s3, %s1134
      $region44: #{tpu_custom_call.1} parent=39 // pred_fallthru
        _
    $region40: #{tpu_custom_call.1} parent=5 // pred_fallthru
      _
  $region6: #{tpu_custom_call.1} parent=0 // loop_footer
    %s13 = sadd.s32 1, %s9
  $region7: #{tpu_custom_call.1} parent=0 // loop_footer_branch
    %8 = sbr.rel target = $region3
  $region8: #{tpu_custom_call.1} parent=0 // loop_exit
    _

</llo_original>
